<compile_context>
chip_gen: v6e
topology: v6e:2x2x1
jax: 0.10.0
libtpu: 0.0.40
codegen_flags: <defaults>
</compile_context>

<pallas_src>
import functools

import numpy as np
import jax
import jax.numpy as jnp
from jax.experimental import pallas as pl
from jax.experimental.pallas import tpu as pltpu


# ----------------------------------------------------------------------------
# Host-side setup: codon probability matrix (module __init__ logic)
# ----------------------------------------------------------------------------
_BASES = "TCAG"
_CODONS = [a + b + c for a in _BASES for b in _BASES for c in _BASES]   # 64 codons
_AMINO = "FFLLSSSSYY**CC*WLLLLPPPPHHQQRRRRIIIMTTTTNNKKSSRRVVVVAAAADDEEGGGG"
translation_map = {c: a for c, a in zip(_CODONS, _AMINO)}               # standard code
start_map = {"ATG": "M", "GTG": "M", "TTG": "M"}
PAD_RESTYPES_GAP = ["<pad>"] + _CODONS + ["-"]                          # 66 tokens


def get_key_from_value(d, val):
    keys = [k for k, v in d.items() if v == val]
    return keys if keys else None


def codon_prob_matrics(num_tokens: int = 66, epsilon: float = 0.1,
                       use_start_codon: bool = False):
    m = np.zeros((num_tokens, num_tokens), np.float32)
    for i in range(num_tokens):
        codon = PAD_RESTYPES_GAP[i] if i < len(PAD_RESTYPES_GAP) else ""
        aminoacid = translation_map.get(codon)
        codons = get_key_from_value(translation_map, aminoacid)
        sim_tokens = ([PAD_RESTYPES_GAP.index(x) for x in codons]
                      if codons is not None else [i])
        if use_start_codon:
            start_amino = start_map.get(codon)
            start_codons = get_key_from_value(start_map, start_amino)
            sim_tokens += ([PAD_RESTYPES_GAP.index(x) for x in start_codons]
                           if start_codons is not None else [i])
            sim_tokens = list(set(sim_tokens))
        m[i, sim_tokens] += 1.0 / len(sim_tokens)
    return m


# ----------------------------------------------------------------------------
# Pallas kernel
# ----------------------------------------------------------------------------
def _soft_ce_kernel(true_l, tile_l, inv_n, need_mask,
                    logits_ref, tgt_ref, mt_ref, o_ref, acc_ref):
    """Soft-label cross entropy, one (batch row, L-tile) block per grid step.

    logits_ref : (1, C, TL) f32   logits for one batch row / L tile
    tgt_ref    : (1, 1, TL) i32   integer codon targets
    mt_ref     : (C, C)     f32   matrics^T (row c = probability of class c given codon k)
    o_ref      : (1, 1, 1)  f32   per-batch partial of the final (negated, mean) loss
    acc_ref    : (1, 1)     f32   VMEM accumulator across the L-tile axis
    """
    j = pl.program_id(1)

    @pl.when(j == 0)
    def _init():
        acc_ref[...] = jnp.zeros_like(acc_ref)

    x = logits_ref[0]                       # (C, TL) f32
    t = tgt_ref[0]                          # (1, TL) i32
    c_dim = x.shape[0]

    # Numerically-stable log-softmax over the class (sublane) axis.
    m = jnp.max(x, axis=0, keepdims=True)                     # (1, TL)
    sh = x - m
    lse = jnp.log(jnp.sum(jnp.exp(sh), axis=0, keepdims=True))  # (1, TL)
    logp = sh - lse                                            # (C, TL)

    # Soft targets via one-hot matmul on the MXU (avoids dynamic gather):
    #   tprob[c, l] = matrics[t_l, c] = (matrics^T @ onehot)[c, l]
    class_ids = jax.lax.broadcasted_iota(jnp.int32, (c_dim, tile_l), 0)
    onehot = (class_ids == t).astype(jnp.float32)              # (C, TL)
    tprob = jnp.dot(mt_ref[...], onehot,
                    preferred_element_type=jnp.float32)        # (C, TL)

    contrib = tprob * logp
    if need_mask:   # static flag: only emitted when L was padded to a tile multiple
        col = j * tile_l + jax.lax.broadcasted_iota(jnp.int32, (1, tile_l), 1)
        contrib = jnp.where(col < true_l, contrib, 0.0)

    part = jnp.sum(contrib, axis=0, keepdims=True)             # (1, TL)  sublane reduce
    part = jnp.sum(part, axis=1, keepdims=True)                # (1, 1)   lane reduce
    acc_ref[...] += part

    @pl.when(j == pl.num_programs(1) - 1)
    def _finalize():
        # negate + 'mean' reduction fused into the epilogue
        o_ref[0] = -acc_ref[...] * inv_n


# ----------------------------------------------------------------------------
# Wrapper
# ----------------------------------------------------------------------------
def _round_up(x, m):
    return (x + m - 1) // m * m


def cls_cross_entropy_loss(logits, target, matrics, *, max_tile_l=512):
    """Pallas equivalent of cls_CrossEntropyLoss.forward.

    logits : (B, C, L) float logits
    target : (B, L)   integer codon ids
    matrics: (C, C)   row-stochastic codon probability matrix
    returns scalar loss (f32)
    """
    B, C, L = logits.shape
    tile_l = min(max_tile_l, _round_up(L, 128))       # lane-dense, 128-aligned tiles
    l_pad = _round_up(L, tile_l)
    need_mask = l_pad != L

    logits = logits.astype(jnp.float32)
    if need_mask:
        logits = jnp.pad(logits, ((0, 0), (0, 0), (0, l_pad - L)))
        target = jnp.pad(target, ((0, 0), (0, l_pad - L)))
    target = target.astype(jnp.int32).reshape(B, 1, l_pad)
    mt = jnp.asarray(matrics, jnp.float32).T          # (C, C), transposed once outside

    num_l_tiles = l_pad // tile_l
    inv_n = 1.0 / float(B * L)

    kernel = functools.partial(_soft_ce_kernel, L, tile_l, inv_n, need_mask)

    flops = 2.0 * B * C * C * l_pad + 8.0 * B * C * l_pad
    transc = B * C * l_pad + B * l_pad                 # exp + log
    bytes_accessed = 4.0 * (B * C * l_pad + B * l_pad + C * C + B)

    per_batch = pl.pallas_call(
        kernel,
        out_shape=jax.ShapeDtypeStruct((B, 1, 1), jnp.float32),
        grid=(B, num_l_tiles),
        in_specs=[
            pl.BlockSpec((1, C, tile_l), lambda b, j: (b, 0, j)),   # logits
            pl.BlockSpec((1, 1, tile_l), lambda b, j: (b, 0, j)),   # targets
            pl.BlockSpec((C, C), lambda b, j: (0, 0)),              # matrics^T (constant)
        ],
        out_specs=pl.BlockSpec((1, 1, 1), lambda b, j: (b, 0, 0)),
        scratch_shapes=[pltpu.VMEM((1, 1), jnp.float32)],
        compiler_params=pltpu.CompilerParams(
            dimension_semantics=("parallel", "arbitrary")),
        cost_estimate=pl.CostEstimate(
            flops=int(flops),
            transcendentals=int(transc),
            bytes_accessed=int(bytes_accessed)),
    )(logits, target, mt)

    return jnp.sum(per_batch)


# ----------------------------------------------------------------------------
# Pure-JAX reference (same math) for verification
# ----------------------------------------------------------------------------
def reference_loss(logits, target, matrics):
    B, C, L = logits.shape
    tprob = jnp.transpose(matrics[target], (0, 2, 1))   # (B, C, L)
    logp = jax.nn.log_softmax(logits.astype(jnp.float32), axis=1)
    return -jnp.sum(tprob * logp) / (B * L)


# ----------------------------------------------------------------------------
# Driver
# ----------------------------------------------------------------------------
if __name__ == "__main__":
    key = jax.random.PRNGKey(0)
    k1, k2 = jax.random.split(key)

    B, C, L = 2, 66, 200            # num_classes = 66 codon tokens
    logits = jax.random.normal(k1, (B, C, L), jnp.float32)
    target = jax.random.randint(k2, (B, L), 0, C)

    matrics = jnp.asarray(
        codon_prob_matrics(num_tokens=C, epsilon=0.0, use_start_codon=False))

    # max_tile_l=128 exercises multi-tile accumulation + the padded-column mask
    loss = cls_cross_entropy_loss(logits, target, matrics, max_tile_l=128)
    loss = jax.block_until_ready(loss)

    ref = reference_loss(logits, target, matrics)
    err = float(jnp.abs(loss - ref))
    assert err < 1e-4, f"mismatch vs reference: {err} ({float(loss)} vs {float(ref)})"
    print("KERNEL_OK")
</pallas_src>

<mosaic_0001>
module attributes {stable_mosaic.version = 11 : i64} {
  func.func @_soft_ce_kernel(%arg0: i32, %arg1: i32, %arg2: memref<1x66x128xf32, #tpu.memory_space<vmem>>, %arg3: memref<1x1x128xi32, #tpu.memory_space<vmem>>, %arg4: memref<66x66xf32, #tpu.memory_space<vmem>>, %arg5: memref<1x1x1xf32, #tpu.memory_space<vmem>>, %arg6: memref<1x1xf32, #tpu.memory_space<vmem>>) attributes {dimension_semantics = [#tpu.dimension_semantics<parallel>, #tpu.dimension_semantics<arbitrary>], iteration_bounds = array<i64: 2, 2>, scalar_prefetch = 0 : i64, scratch_operands = 1 : i64, tpu.core_type = #tpu.core_type<tc>, window_params = [{transform_indices = @transform_0, window_bounds = array<i64: 1, 66, 128>}, {transform_indices = @transform_1, window_bounds = array<i64: 1, 1, 128>}, {pipeline_mode = #tpu.pipeline_mode<synchronous>, transform_indices = @transform_2, window_bounds = array<i64: 66, 66>}, {transform_indices = @transform_3, window_bounds = array<i64: 1, 1, 1>}]} {
    %c0_i32 = arith.constant 0 : i32
    %0 = arith.cmpi eq, %arg1, %c0_i32 : i32
    %1 = arith.extui %0 : i1 to i32
    %c0_i32_0 = arith.constant 0 : i32
    %2 = arith.cmpi ne, %1, %c0_i32_0 : i32
    scf.if %2 {
      %cst_18 = arith.constant 0.000000e+00 : f32
      %45 = vector.broadcast %cst_18 : f32 to vector<1x1xf32>
      %c0_19 = arith.constant 0 : index
      %c0_20 = arith.constant 0 : index
      %46 = vector.load %arg6[%c0_19, %c0_20] : memref<1x1xf32, #tpu.memory_space<vmem>>, vector<1x1xf32>
      tpu.vector_store %arg6[%c0_19, %c0_20], %45 {strides = array<i32>} : memref<1x1xf32, #tpu.memory_space<vmem>>, vector<1x1xf32>,
    } else {
    }
    %c0 = arith.constant 0 : index
    %c0_1 = arith.constant 0 : index
    %c0_2 = arith.constant 0 : index
    %3 = vector.load %arg2[%c0, %c0_1, %c0_2] : memref<1x66x128xf32, #tpu.memory_space<vmem>>, vector<1x66x128xf32>
    %4 = vector.shape_cast %3 : vector<1x66x128xf32> to vector<66x128xf32>
    %c0_3 = arith.constant 0 : index
    %c0_4 = arith.constant 0 : index
    %c0_5 = arith.constant 0 : index
    %5 = vector.load %arg3[%c0_3, %c0_4, %c0_5] : memref<1x1x128xi32, #tpu.memory_space<vmem>>, vector<1x1x128xi32>
    %6 = vector.shape_cast %5 : vector<1x1x128xi32> to vector<1x128xi32>
    %cst = arith.constant dense<0xFF800000> : vector<128xf32>
    %7 = vector.multi_reduction <maximumf>, %4, %cst [0] : vector<66x128xf32> to vector<128xf32>
    %8 = vector.shape_cast %7 : vector<128xf32> to vector<1x128xf32>
    %9 = vector.broadcast %8 : vector<1x128xf32> to vector<66x128xf32>
    %10 = arith.subf %4, %9 : vector<66x128xf32>
    %11 = math.exp %10 : vector<66x128xf32>
    %cst_6 = arith.constant dense<0.000000e+00> : vector<128xf32>
    %12 = vector.multi_reduction <add>, %11, %cst_6 [0] : vector<66x128xf32> to vector<128xf32>
    %13 = vector.shape_cast %12 : vector<128xf32> to vector<1x128xf32>
    %14 = math.log %13 : vector<1x128xf32>
    %15 = vector.broadcast %14 : vector<1x128xf32> to vector<66x128xf32>
    %16 = arith.subf %10, %15 : vector<66x128xf32>
    %17 = tpu.iota {dimensions = array<i32: 0>} : vector<66x128xi32>
    %18 = vector.broadcast %6 : vector<1x128xi32> to vector<66x128xi32>
    %19 = arith.cmpi eq, %17, %18 : vector<66x128xi32>
    %20 = arith.extui %19 : vector<66x128xi1> to vector<66x128xi32>
    %21 = arith.sitofp %20 : vector<66x128xi32> to vector<66x128xf32>
    %c0_7 = arith.constant 0 : index
    %c0_8 = arith.constant 0 : index
    %22 = vector.load %arg4[%c0_7, %c0_8] : memref<66x66xf32, #tpu.memory_space<vmem>>, vector<66x66xf32>
    %cst_9 = arith.constant dense<0.000000e+00> : vector<66x128xf32>
    %23 = tpu.matmul %22, %21, %cst_9 {dimension_numbers = #tpu.dot_dimension_numbers<[1], [0], [0], [1], [0, 0, 1, 1], [], []>} : vector<66x66xf32>, vector<66x128xf32>, vector<66x128xf32> -> vector<66x128xf32>
    %24 = arith.mulf %23, %16 : vector<66x128xf32>
    %c128_i32 = arith.constant 128 : i32
    %25 = arith.muli %arg1, %c128_i32 : i32
    %26 = tpu.iota {dimensions = array<i32: 1>} : vector<1x128xi32>
    %27 = vector.broadcast %25 : i32 to vector<1x128xi32>
    %28 = arith.addi %27, %26 : vector<1x128xi32>
    %c200_i32 = arith.constant 200 : i32
    %29 = vector.broadcast %c200_i32 : i32 to vector<1x128xi32>
    %30 = arith.cmpi slt, %28, %29 : vector<1x128xi32>
    %cst_10 = arith.constant 0.000000e+00 : f32
    %31 = vector.shape_cast %30 : vector<1x128xi1> to vector<1x128xi1>
    %32 = vector.broadcast %31 : vector<1x128xi1> to vector<66x128xi1>
    %33 = vector.broadcast %cst_10 : f32 to vector<66x128xf32>
    %34 = arith.select %32, %24, %33 : vector<66x128xi1>, vector<66x128xf32>
    %cst_11 = arith.constant dense<0.000000e+00> : vector<128xf32>
    %35 = vector.multi_reduction <add>, %34, %cst_11 [0] : vector<66x128xf32> to vector<128xf32>
    %36 = vector.shape_cast %35 : vector<128xf32> to vector<1x128xf32>
    %cst_12 = arith.constant dense<0.000000e+00> : vector<1xf32>
    %37 = vector.multi_reduction <add>, %36, %cst_12 [1] : vector<1x128xf32> to vector<1xf32>
    %38 = vector.shape_cast %37 : vector<1xf32> to vector<1x1xf32>
    %c0_13 = arith.constant 0 : index
    %c0_14 = arith.constant 0 : index
    %39 = vector.load %arg6[%c0_13, %c0_14] : memref<1x1xf32, #tpu.memory_space<vmem>>, vector<1x1xf32>
    %40 = arith.addf %39, %38 : vector<1x1xf32>
    %c0_15 = arith.constant 0 : index
    %c0_16 = arith.constant 0 : index
    %41 = vector.load %arg6[%c0_15, %c0_16] : memref<1x1xf32, #tpu.memory_space<vmem>>, vector<1x1xf32>
    tpu.vector_store %arg6[%c0_15, %c0_16], %40 {strides = array<i32>} : memref<1x1xf32, #tpu.memory_space<vmem>>, vector<1x1xf32>,
    %c1_i32 = arith.constant 1 : i32
    %42 = arith.cmpi eq, %arg1, %c1_i32 : i32
    %43 = arith.extui %42 : i1 to i32
    %c0_i32_17 = arith.constant 0 : i32
    %44 = arith.cmpi ne, %43, %c0_i32_17 : i32
    scf.if %44 {
      %c0_18 = arith.constant 0 : index
      %c0_19 = arith.constant 0 : index
      %45 = vector.load %arg6[%c0_18, %c0_19] : memref<1x1xf32, #tpu.memory_space<vmem>>, vector<1x1xf32>
      %cst_20 = arith.constant 0.000000e+00 : f32
      %46 = vector.broadcast %cst_20 : f32 to vector<1x1xf32>
      %47 = arith.subf %46, %45 : vector<1x1xf32>
      %cst_21 = arith.constant 2.500000e-03 : f32
      %48 = vector.broadcast %cst_21 : f32 to vector<1x1xf32>
      %49 = arith.mulf %47, %48 : vector<1x1xf32>
      %c0_22 = arith.constant 0 : index
      %c0_23 = arith.constant 0 : index
      %c0_24 = arith.constant 0 : index
      %50 = vector.load %arg5[%c0_22, %c0_23, %c0_24] : memref<1x1x1xf32, #tpu.memory_space<vmem>>, vector<1x1x1xf32>
      %51 = vector.shape_cast %50 : vector<1x1x1xf32> to vector<1x1xf32>
      %52 = vector.shape_cast %49 : vector<1x1xf32> to vector<1x1x1xf32>
      tpu.vector_store %arg5[%c0_22, %c0_23, %c0_24], %52 {strides = array<i32>} : memref<1x1x1xf32, #tpu.memory_space<vmem>>, vector<1x1x1xf32>,
    } else {
    }
    return
  }
  func.func @transform_0(%arg0: i32, %arg1: i32) -> (i32, i32, i32) {
    %c0_i32 = arith.constant 0 : i32
    %c0_i32_0 = arith.constant 0 : i32
    return %arg0, %c0_i32, %arg1 : i32, i32, i32
  }
  func.func @transform_1(%arg0: i32, %arg1: i32) -> (i32, i32, i32) {
    %c0_i32 = arith.constant 0 : i32
    %c0_i32_0 = arith.constant 0 : i32
    return %arg0, %c0_i32, %arg1 : i32, i32, i32
  }
  func.func @transform_2(%arg0: i32, %arg1: i32) -> (i32, i32) {
    %c0_i32 = arith.constant 0 : i32
    %c0_i32_0 = arith.constant 0 : i32
    %c0_i32_1 = arith.constant 0 : i32
    return %c0_i32, %c0_i32_0 : i32, i32
  }
  func.func @transform_3(%arg0: i32, %arg1: i32) -> (i32, i32, i32) {
    %c0_i32 = arith.constant 0 : i32
    %c0_i32_0 = arith.constant 0 : i32
    %c0_i32_1 = arith.constant 0 : i32
    return %arg0, %c0_i32, %c0_i32_0 : i32, i32, i32
  }
}

</mosaic_0001>

<llo_original>
// kernel: tpu_custom_call.1
$region0: #{tpu_custom_call.1}
  #allocation0 [shape = 'u32[]', space=smem, size = 0x4, offset = 0x4, fixed_abs, tag = 'smem constant byte address 0x4 - core index']
  #allocation1 [shape = 'u32[144,128]{1,0:T(1,128)}', space=vmem, size = 0x12000, scoped, tag = 'internal scratch']
  #allocation2 [shape = 'f32[1,1]{1,0:T(1,128)}', space=vmem, size = 0x200, scoped, tag = 'scratch operand']
  %s0 = inlined_call_operand.vmem [shape: f32[2,66,256], index: 0, kind: input, shape index: {}]
  %s1 = inlined_call_operand.vmem [shape: s32[2,1,256], index: 1, kind: input, shape index: {}]
  %s2 = inlined_call_operand.vmem [shape: f32[66,66], index: 2, kind: input, shape index: {}]
  %s3 = inlined_call_operand.vmem [shape: f32[2,1,1], index: 3, kind: output, shape index: {}]
  %s4 = sld [smem:[#allocation0]]
  $region91: #{tpu_custom_call.1} parent=0
    _
  %s6 = ssub.s32 1, %s4
  %s7 = scalar_select 0, %s6, %s4
  $region1: #{tpu_custom_call.1} parent=0
    #allocation3 [shape = 'u8[73728]{0}', space=vmem, size = 0x12000, scoped, tag = 'input window, operand 0']
    loop: start=0, step=1, limit=6
    $region2: #{tpu_custom_call.1} parent=1 // loop_pre_header
      _
    $region3: #{tpu_custom_call.1} parent=1 // loop_header
      %s9 = sphi 0, %s13
      %p10 = scmp.ge.s32.totalorder %s9, 6
      %s16 = sphi 0, %s28
      %s17 = sphi 0, %s24
      %s18 = sphi 0, %s16
      %s19 = sphi 0, %s17
      %s20 = sphi 0, %s18
      %s21 = sphi 0, %s19
      %s33 = sphi 0, %s35
      %s36 = sphi 0, %s33
      %s37 = sphi 0, %s36
      %s53 = sphi 0, %s37
      %s61 = sphi 0, %s63
      %s64 = sphi 0, %s61
      %s65 = sphi 0, %s64
      %s81 = sphi 0, %s65
      %s85 = sphi 0, %s85
      %s87 = sphi 0, %s85
      %s88 = sphi 0, %s87
      %s102 = sphi 0, %s88
      %s108 = sphi 0, %s110
      %s111 = sphi 0, %s108
      %s112 = sphi 0, %s111
      %s128 = sphi 0, %s112
    $region4: #{tpu_custom_call.1} parent=1 // loop_header_branch
      %12 = sbr.rel (%p10) target = $region8
    $region5: #{tpu_custom_call.1} parent=1 // loop_body
      %s14 = ssub.s32 %s9, 1
      %s15 = ssub.s32 %s9, 2
      %s22 = sadd.s32 1, %s17
      %p23 = scmp.ge.s32.totalorder %s22, 2
      %s24 = scalar_select %p23, 0, %s22
      %s25 = sadd.s32 1, %s16
      %s26 = scalar_select %p23, %s25, %s16
      %p27 = scmp.ge.s32.totalorder %s26, 2
      %s28 = scalar_select %p27, 0, %s26
      %s29 = ssub.s32 %s16, %s28
      %s30 = ssub.s32 %s17, %s24
      %s31 = sor.u32 %s29, %s30
      %p32 = scmp.eq.s32.totalorder %s31, 0
      %s34 = sadd.s32 %s33, 1
      %s35 = scalar_select %p32, %s33, %s34
      %p38 = pneg %p32
      %p39 = scmp.eq.s32.totalorder %s9, 3
      %p40 = por %p38, %p39
      %p41 = scmp.ne.s32.totalorder %s33, %s36
      %p42 = scmp.eq.s32.totalorder %s9, 0
      %p43 = por %p41, %p42
      %p44 = scmp.ne.s32.totalorder %s33, %s36
      %p45 = scmp.eq.s32.totalorder %s14, 3
      %p46 = por %p44, %p45
      %p47 = scmp.ne.s32.totalorder %s36, %s37
      %p48 = scmp.eq.s32.totalorder %s14, 0
      %p49 = por %p47, %p48
      %p50 = scmp.ne.s32.totalorder %s36, %s37
      %p51 = scmp.eq.s32.totalorder %s15, 3
      %p52 = por %p50, %p51
      %p54 = scmp.ne.s32.totalorder %s37, %s53
      %p55 = scmp.eq.s32.totalorder %s15, 0
      %p56 = por %p54, %p55
      %s57 = ssub.s32 %s16, %s28
      %s58 = ssub.s32 %s17, %s24
      %s59 = sor.u32 %s57, %s58
      %p60 = scmp.eq.s32.totalorder %s59, 0
      %s62 = sadd.s32 %s61, 1
      %s63 = scalar_select %p60, %s61, %s62
      %p66 = pneg %p60
      %p67 = scmp.eq.s32.totalorder %s9, 3
      %p68 = por %p66, %p67
      %p69 = scmp.ne.s32.totalorder %s61, %s64
      %p70 = scmp.eq.s32.totalorder %s9, 0
      %p71 = por %p69, %p70
      %p72 = scmp.ne.s32.totalorder %s61, %s64
      %p73 = scmp.eq.s32.totalorder %s14, 3
      %p74 = por %p72, %p73
      %p75 = scmp.ne.s32.totalorder %s64, %s65
      %p76 = scmp.eq.s32.totalorder %s14, 0
      %p77 = por %p75, %p76
      %p78 = scmp.ne.s32.totalorder %s64, %s65
      %p79 = scmp.eq.s32.totalorder %s15, 3
      %p80 = por %p78, %p79
      %p82 = scmp.ne.s32.totalorder %s65, %s81
      %p83 = scmp.eq.s32.totalorder %s15, 0
      %p84 = por %p82, %p83
      %s86 = sadd.s32 %s85, 1
      %p89 = scmp.eq.s32.totalorder %s9, 3
      %p90 = scmp.ne.s32.totalorder %s85, %s87
      %p91 = scmp.eq.s32.totalorder %s9, 0
      %p92 = por %p90, %p91
      %p93 = scmp.ne.s32.totalorder %s85, %s87
      %p94 = scmp.eq.s32.totalorder %s14, 3
      %p95 = por %p93, %p94
      %p96 = scmp.ne.s32.totalorder %s87, %s88
      %p97 = scmp.eq.s32.totalorder %s14, 0
      %p98 = por %p96, %p97
      %p99 = scmp.ne.s32.totalorder %s87, %s88
      %p100 = scmp.eq.s32.totalorder %s15, 3
      %p101 = por %p99, %p100
      %p103 = scmp.ne.s32.totalorder %s88, %s102
      %p104 = scmp.eq.s32.totalorder %s15, 0
      %p105 = por %p103, %p104
      %s106 = ssub.s32 %s16, %s28
      %p107 = scmp.eq.s32.totalorder %s106, 0
      %s109 = sadd.s32 %s108, 1
      %s110 = scalar_select %p107, %s108, %s109
      %p113 = pneg %p107
      %p114 = scmp.eq.s32.totalorder %s9, 3
      %p115 = por %p113, %p114
      %p116 = scmp.ne.s32.totalorder %s108, %s111
      %p117 = scmp.eq.s32.totalorder %s9, 0
      %p118 = por %p116, %p117
      %p119 = scmp.ne.s32.totalorder %s108, %s111
      %p120 = scmp.eq.s32.totalorder %s14, 3
      %p121 = por %p119, %p120
      %p122 = scmp.ne.s32.totalorder %s111, %s112
      %p123 = scmp.eq.s32.totalorder %s14, 0
      %p124 = por %p122, %p123
      %p125 = scmp.ne.s32.totalorder %s111, %s112
      %p126 = scmp.eq.s32.totalorder %s15, 3
      %p127 = por %p125, %p126
      %p129 = scmp.ne.s32.totalorder %s112, %s128
      %p130 = scmp.eq.s32.totalorder %s15, 0
      %p131 = por %p129, %p130
      %p132 = scmp.le.s32.totalorder 1, %s9
      %p133 = scmp.lt.s32.totalorder %s9, 5
      %p134 = pnand %p132, %p133
      %p135 = pneg %p134
      // Predicated region
      $region9: #{tpu_custom_call.1} parent=5 // pred_check
        _
      $region10: #{tpu_custom_call.1} parent=5 // pred_check_branch
        %137 = sbr.rel (%p134) target = $region12
      $region11: #{tpu_custom_call.1} parent=5 // pred_region
        %s138 = ssub.s32 %s9, 1
        // Predicated region
        $region13: #{tpu_custom_call.1} parent=11 // pred_check
          %p139 = pneg %p98
        $region14: #{tpu_custom_call.1} parent=11 // pred_check_branch
          %141 = sbr.rel (%p139) target = $region16
        $region15: #{tpu_custom_call.1} parent=11 // pred_region
          _
        $region16: #{tpu_custom_call.1} parent=11 // pred_fallthru
          _
      $region12: #{tpu_custom_call.1} parent=5 // pred_fallthru
        _
      %p142 = scmp.lt.s32.totalorder %s9, 4
      // Predicated region
      $region17: #{tpu_custom_call.1} parent=5 // pred_check
        %p143 = pneg %p142
      $region18: #{tpu_custom_call.1} parent=5 // pred_check_branch
        %145 = sbr.rel (%p143) target = $region20
      $region19: #{tpu_custom_call.1} parent=5 // pred_region
        // Predicated region
        $region21: #{tpu_custom_call.1} parent=19 // pred_check
          %p146 = pneg %p43
        $region22: #{tpu_custom_call.1} parent=19 // pred_check_branch
          %148 = sbr.rel (%p146) target = $region24
        $region23: #{tpu_custom_call.1} parent=19 // pred_region
          %s149 = sand.u32 %s33, 1
          %s150 = sand.u32 %s33, 1
          %s151 = smul.addr %s150, 72
          %s152 = scalar_lea.vmem [#allocation3], %s151
          %s153 = smul.addr %s16, 18
          %s154 = sadd.s32 %s17, %s153
          %s155 = smul.addr %s154, 8
          %s156 = scalar_lea.vmem %s0, %s155
          // Predicated region
          $region25: #{tpu_custom_call.1} parent=23 // pred_check
            _
          $region26: #{tpu_custom_call.1} parent=23 // pred_check_branch
            %158 = sbr.rel (0) target = $region28
          $region27: #{tpu_custom_call.1} parent=23 // pred_region
            // Predicated region
            $region29: #{tpu_custom_call.1} parent=27 // pred_check
              _
            $region30: #{tpu_custom_call.1} parent=27 // pred_check_branch
              %160 = sbr.rel (0) target = $region32
            $region31: #{tpu_custom_call.1} parent=27 // pred_region
              // Predicated region
              $region44: #{tpu_custom_call.1} parent=31 // pred_check
                _
              $region45: #{tpu_custom_call.1} parent=31 // pred_check_branch
                %192 = sbr.rel (0) target = $region47
              $region46: #{tpu_custom_call.1} parent=31 // pred_region
                loop: start=0, step=1, limit=1
                $region48: #{tpu_custom_call.1} parent=46 // loop_pre_header
                  _
                $region49: #{tpu_custom_call.1} parent=46 // loop_header
                  %s194 = sphi 0, %s198
                  %p195 = scmp.ge.s32.totalorder %s194, 1
                  %s199 = sphi %s156, %s156
                  %s200 = sphi %s152, %s152
                $region50: #{tpu_custom_call.1} parent=46 // loop_header_branch
                  %197 = sbr.rel (%p195) target = $region54
                $region51: #{tpu_custom_call.1} parent=46 // loop_body
                  %v201 = vld [vmem:[%s199] sm:$0xff]
                  %202 = vst [vmem:[%s200] sm:$0xff] %v201
                  %v203 = vld [vmem:[%s199 + $0x10] sm:$0xff]
                  %204 = vst [vmem:[%s200 + $0x8] sm:$0xff] %v203
                  %v205 = vld [vmem:[%s199 + $0x20] sm:$0xff]
                  %206 = vst [vmem:[%s200 + $0x10] sm:$0xff] %v205
                  %v207 = vld [vmem:[%s199 + $0x30] sm:$0xff]
                  %208 = vst [vmem:[%s200 + $0x18] sm:$0xff] %v207
                  %v209 = vld [vmem:[%s199 + $0x40] sm:$0xff]
                  %210 = vst [vmem:[%s200 + $0x20] sm:$0xff] %v209
                  %v211 = vld [vmem:[%s199 + $0x50] sm:$0xff]
                  %212 = vst [vmem:[%s200 + $0x28] sm:$0xff] %v211
                  %v213 = vld [vmem:[%s199 + $0x60] sm:$0xff]
                  %214 = vst [vmem:[%s200 + $0x30] sm:$0xff] %v213
                  %v215 = vld [vmem:[%s199 + $0x70] sm:$0xff]
                  %216 = vst [vmem:[%s200 + $0x38] sm:$0xff] %v215
                  %v217 = vld [vmem:[%s199 + $0x80] sm:$0xff]
                  %218 = vst [vmem:[%s200 + $0x40] sm:$0xff] %v217
                $region52: #{tpu_custom_call.1} parent=46 // loop_footer
                  %s198 = sadd.s32 1, %s194
                $region53: #{tpu_custom_call.1} parent=46 // loop_footer_branch
                  %193 = sbr.rel target = $region49
                $region54: #{tpu_custom_call.1} parent=46 // loop_exit
                  _
              $region47: #{tpu_custom_call.1} parent=31 // pred_fallthru
                _
              // Predicated region
              $region55: #{tpu_custom_call.1} parent=31 // pred_check
                _
              $region56: #{tpu_custom_call.1} parent=31 // pred_check_branch
                %220 = sbr.rel target = $region58
              $region57: #{tpu_custom_call.1} parent=31 // pred_region
                _
              $region58: #{tpu_custom_call.1} parent=31 // pred_fallthru
                _
            $region32: #{tpu_custom_call.1} parent=27 // pred_fallthru
              _
            // Predicated region
            $region33: #{tpu_custom_call.1} parent=27 // pred_check
              _
            $region34: #{tpu_custom_call.1} parent=27 // pred_check_branch
              %162 = sbr.rel target = $region36
            $region35: #{tpu_custom_call.1} parent=27 // pred_region
              %s164 = ssub.s32 256, 1
              loop: start=0, step=1, limit=1
              $region37: #{tpu_custom_call.1} parent=35 // loop_pre_header
                _
              $region38: #{tpu_custom_call.1} parent=35 // loop_header
                %s166 = sphi 0, %s170
                %p167 = scmp.ge.s32.totalorder %s166, 1
                %s171 = sphi %s156, %s156
                %s172 = sphi %s152, %s152
              $region39: #{tpu_custom_call.1} parent=35 // loop_header_branch
                %169 = sbr.rel (%p167) target = $region43
              $region40: #{tpu_custom_call.1} parent=35 // loop_body
                %v173 = vld [vmem:[%s171] sm:%s164]
                %174 = vst [vmem:[%s172] sm:%s164] %v173
                %v175 = vld [vmem:[%s171 + $0x10] sm:%s164]
                %176 = vst [vmem:[%s172 + $0x8] sm:%s164] %v175
                %v177 = vld [vmem:[%s171 + $0x20] sm:%s164]
                %178 = vst [vmem:[%s172 + $0x10] sm:%s164] %v177
                %v179 = vld [vmem:[%s171 + $0x30] sm:%s164]
                %180 = vst [vmem:[%s172 + $0x18] sm:%s164] %v179
                %v181 = vld [vmem:[%s171 + $0x40] sm:%s164]
                %182 = vst [vmem:[%s172 + $0x20] sm:%s164] %v181
                %v183 = vld [vmem:[%s171 + $0x50] sm:%s164]
                %184 = vst [vmem:[%s172 + $0x28] sm:%s164] %v183
                %v185 = vld [vmem:[%s171 + $0x60] sm:%s164]
                %186 = vst [vmem:[%s172 + $0x30] sm:%s164] %v185
                %v187 = vld [vmem:[%s171 + $0x70] sm:%s164]
                %188 = vst [vmem:[%s172 + $0x38] sm:%s164] %v187
                %v189 = vld [vmem:[%s171 + $0x80] sm:%s164]
                %190 = vst [vmem:[%s172 + $0x40] sm:%s164] %v189
              $region41: #{tpu_custom_call.1} parent=35 // loop_footer
                %s170 = sadd.s32 1, %s166
              $region42: #{tpu_custom_call.1} parent=35 // loop_footer_branch
                %165 = sbr.rel target = $region38
              $region43: #{tpu_custom_call.1} parent=35 // loop_exit
                _
            $region36: #{tpu_custom_call.1} parent=27 // pred_fallthru
              _
          $region28: #{tpu_custom_call.1} parent=23 // pred_fallthru
            _
          %221 = vnop
        $region24: #{tpu_custom_call.1} parent=19 // pred_fallthru
          _
        // Predicated region
        $region59: #{tpu_custom_call.1} parent=19 // pred_check
          %p222 = pneg %p71
        $region60: #{tpu_custom_call.1} parent=19 // pred_check_branch
          %224 = sbr.rel (%p222) target = $region62
        $region61: #{tpu_custom_call.1} parent=19 // pred_region
          %p225 = scmp.lt.s32.totalorder %s16, 1
          %s226 = scalar_select %p225, %s16, 1
          %p227 = scmp.lt.s32.totalorder %s17, 1
          %s228 = scalar_select %p227, %s17, 1
          %s229 = smul.addr %s226, 2
          %s230 = sadd.s32 %s228, %s229
          %s231 = scalar_lea.vmem %s1, %s230
        $region62: #{tpu_custom_call.1} parent=19 // pred_fallthru
          _
      $region20: #{tpu_custom_call.1} parent=5 // pred_fallthru
        _
      %p232 = scmp.le.s32.totalorder 1, %s9
      %p233 = scmp.lt.s32.totalorder %s9, 5
      %p234 = pnand %p232, %p233
      %p235 = pneg %p234
      // Predicated region
      $region63: #{tpu_custom_call.1} parent=5 // pred_check
        _
      $region64: #{tpu_custom_call.1} parent=5 // pred_check_branch
        %237 = sbr.rel (%p234) target = $region66
      $region65: #{tpu_custom_call.1} parent=5 // pred_region
        %s238 = ssub.s32 %s9, 1
        %s239 = sand.u32 %s36, 1
        %s240 = sand.u32 %s36, 1
        %s241 = smul.addr %s240, 72
        %s242 = scalar_lea.vmem [#allocation3], %s241
        // Predicated region
        $region67: #{tpu_custom_call.1} parent=65 // pred_check
          %p243 = pneg %p49
        $region68: #{tpu_custom_call.1} parent=65 // pred_check_branch
          %245 = sbr.rel (%p243) target = $region70
        $region69: #{tpu_custom_call.1} parent=65 // pred_region
          _
        $region70: #{tpu_custom_call.1} parent=65 // pred_fallthru
          _
        %s246 = sand.u32 %s36, 1
        %s247 = sand.u32 %s36, 1
        %s248 = smul.addr %s247, 72
        %s249 = scalar_lea.vmem [#allocation3], %s248
        %p250 = pneg %p49
        %p251 = pneg %p46
        %p252 = scmp.lt.s32.totalorder %s18, 1
        %s253 = scalar_select %p252, %s18, 1
        %p254 = scmp.lt.s32.totalorder %s19, 1
        %s255 = scalar_select %p254, %s19, 1
        %s256 = smul.addr %s253, 2
        %s257 = sadd.s32 %s255, %s256
        %s258 = scalar_lea.vmem %s1, %s257
        %p259 = pneg %p77
        %p260 = pneg %p74
        %p261 = pneg %p98
        %p262 = pneg %p95
        %p263 = pneg %p124
        %p264 = pneg %p121
        %p265 = scmp.lt.s32.totalorder %s18, 1
        %s266 = scalar_select %p265, %s18, 1
        %s267 = scalar_lea.vmem %s3, %s266
        %p268 = scmp.lt.s32.totalorder %s18, 1
        %s269 = scalar_select %p268, %s18, 1
        %p270 = scmp.lt.s32.totalorder %s19, 1
        %s271 = scalar_select %p270, %s19, 1
        %s272 = smul.addr %s269, 2
        %s273 = sadd.s32 %s271, %s272
        %s274 = scalar_lea.vmem %s1, %s273
        %p275 = scmp.lt.s32.totalorder %s18, 1
        %s276 = scalar_select %p275, %s18, 1
        %s277 = scalar_lea.vmem %s3, %s276
        %p278 = scmp.eq.s32.totalorder %s19, 0
        // Predicated region
        $region71: #{tpu_custom_call.1} parent=65 // pred_check
          %p279 = pneg %p278
        $region72: #{tpu_custom_call.1} parent=65 // pred_check_branch
          %281 = sbr.rel (%p279) target = $region74
        $region73: #{tpu_custom_call.1} parent=65 // pred_region
          %vm282 = vcmask 0
          %283 = vst.msk [vmem:[#allocation2] sm:$0x1] %vm282, 0.0
        $region74: #{tpu_custom_call.1} parent=65 // pred_fallthru
          _
        %v284 = vld [vmem:[%s242] sm:$0xff]
        %v285 = vld [vmem:[%s242 + $0x8] sm:$0xff]
        %v286 = vld [vmem:[%s242 + $0x10] sm:$0xff]
        %v287 = vld [vmem:[%s242 + $0x18] sm:$0xff]
        %v288 = vld [vmem:[%s242 + $0x20] sm:$0xff]
        %v289 = vld [vmem:[%s242 + $0x28] sm:$0xff]
        %v290 = vld [vmem:[%s242 + $0x30] sm:$0xff]
        %v291 = vld [vmem:[%s242 + $0x38] sm:$0xff]
        %v292 = vld [vmem:[%s242 + $0x40] sm:$0x3]
        %v293 = vld [vmem:[%s274] sm:$0x1]
        %v294 = vmax.f32 %v284, %v288
        %v295 = vmax.f32 %v285, %v289
        %v296 = vmax.f32 %v286, %v290
        %v297 = vmax.f32 %v287, %v291
        %vm298 = vcmask 1041408
        %v299 = vsel %vm298, %v292, -inf
        %v300 = vmax.f32 %v294, %v299
        %v301 = vmax.f32 %v300, %v295
        %v302 = vmax.f32 %v296, %v297
        %v303 = vmax.f32 %v301, %v302
        %v304 = vrot.slane %v303, 4
        %v305 = vmax.f32 %v303, %v304
        %v306 = vrot.slane %v305, 2
        %v307 = vmax.f32 %v305, %v306
        %v308 = vrot.slane %v307, 1
        %v309 = vmax.f32 %v307, %v308
        %v310 = vsub.f32 %v284, %v309
        %v311 = vsub.f32 %v285, %v309
        %v312 = vsub.f32 %v286, %v309
        %v313 = vsub.f32 %v287, %v309
        %v314 = vsub.f32 %v288, %v309
        %v315 = vsub.f32 %v289, %v309
        %v316 = vsub.f32 %v290, %v309
        %v317 = vsub.f32 %v291, %v309
        %v318 = vsub.f32 %v292, %v309
        %v319 = vmul.f32 %v310, 1.442695
        %v320 = vpow.pop %v319
        %v321 = vmul.f32 %v311, 1.442695
        %v322 = vpow.pop %v321
        %v323 = vmul.f32 %v312, 1.442695
        %v324 = vpow.pop %v323
        %v325 = vmul.f32 %v313, 1.442695
        %v326 = vpow.pop %v325
        %v327 = vmul.f32 %v314, 1.442695
        %v328 = vpow.pop %v327
        %v329 = vmul.f32 %v315, 1.442695
        %v330 = vpow.pop %v329
        %v331 = vmul.f32 %v316, 1.442695
        %v332 = vpow.pop %v331
        %v333 = vmul.f32 %v317, 1.442695
        %v334 = vpow.pop %v333
        %v335 = vmul.f32 %v318, 1.442695
        %v336 = vpow.pop %v335
        %v337 = vadd.f32 %v320, %v322
        %v338 = vadd.f32 %v337, %v324
        %v339 = vadd.f32 %v338, %v326
        %v340 = vadd.f32 %v339, %v328
        %v341 = vadd.f32 %v340, %v330
        %v342 = vadd.f32 %v341, %v332
        %v343 = vadd.f32 %v342, %v334
        %v344 = vsel %vm298, %v336, 0.0
        %v345 = vadd.f32 %v343, %v344
        %v346 = vrot.slane %v345, 4
        %v347 = vadd.f32 %v345, %v346
        %v348 = vrot.slane %v347, 2
        %v349 = vadd.f32 %v347, %v348
        %v350 = vrot.slane %v349, 1
        %v351 = vadd.f32 %v349, %v350
        %v352 = vlog2.pop %v351
        %v353 = vmul.f32 %v352, 0.6931472
        %v354 = vsub.f32 %v310, %v353
        %v355 = vsub.f32 %v311, %v353
        %v356 = vsub.f32 %v312, %v353
        %v357 = vsub.f32 %v313, %v353
        %v358 = vsub.f32 %v314, %v353
        %v359 = vsub.f32 %v315, %v353
        %v360 = vsub.f32 %v316, %v353
        %v361 = vsub.f32 %v317, %v353
        %v362 = vsub.f32 %v318, %v353
        %v363 = vlaneseq
        %v364 = vshrl.u32 %v363, 7
        %v365 = vadd.s32 %v364, 8
        %v366 = vadd.s32 %v364, 16
        %v367 = vadd.s32 %v364, 24
        %v368 = vadd.s32 %v364, 32
        %v369 = vadd.s32 %v364, 40
        %v370 = vadd.s32 %v364, 48
        %v371 = vadd.s32 %v364, 56
        %v372 = vadd.s32 %v364, 64
        %v373 = vlaneseq
        %v374 = vshrl.u32 %v373, 7
        %v375 = vsub.s32 0, %v374
        %v376 = vrot.slane %v293, %v375
        %vm377 = vcmp.eq.s32.totalorder %v364, %v376
        %vm378 = vcmp.eq.s32.totalorder %v365, %v376
        %vm379 = vcmp.eq.s32.totalorder %v366, %v376
        %vm380 = vcmp.eq.s32.totalorder %v367, %v376
        %vm381 = vcmp.eq.s32.totalorder %v368, %v376
        %vm382 = vcmp.eq.s32.totalorder %v369, %v376
        %vm383 = vcmp.eq.s32.totalorder %v370, %v376
        %vm384 = vcmp.eq.s32.totalorder %v371, %v376
        %vm385 = vcmp.eq.s32.totalorder %v372, %v376
        %v386 = vsel %vm377, 1, 0
        %v387 = vsel %vm378, 1, 0
        %v388 = vsel %vm379, 1, 0
        %v389 = vsel %vm380, 1, 0
        %v390 = vsel %vm381, 1, 0
        %v391 = vsel %vm382, 1, 0
        %v392 = vsel %vm383, 1, 0
        %v393 = vsel %vm384, 1, 0
        %v394 = vsel %vm385, 1, 0
        %v395 = vcvt.s32.f32 %v386
        %v396 = vcvt.s32.f32 %v387
        %v397 = vcvt.s32.f32 %v388
        %v398 = vcvt.s32.f32 %v389
        %v399 = vcvt.s32.f32 %v390
        %v400 = vcvt.s32.f32 %v391
        %v401 = vcvt.s32.f32 %v392
        %v402 = vcvt.s32.f32 %v393
        %v403 = vcvt.s32.f32 %v394
        %v404 = vld [vmem:[%s2] sm:$0xff]
        %v405 = vld [vmem:[%s2 + $0x8] sm:$0xff]
        %v406 = vld [vmem:[%s2 + $0x10] sm:$0xff]
        %v407 = vld [vmem:[%s2 + $0x18] sm:$0xff]
        %v408 = vld [vmem:[%s2 + $0x20] sm:$0xff]
        %v409 = vld [vmem:[%s2 + $0x28] sm:$0xff]
        %v410 = vld [vmem:[%s2 + $0x30] sm:$0xff]
        %v411 = vld [vmem:[%s2 + $0x38] sm:$0xff]
        %v412 = vld [vmem:[%s2 + $0x40] sm:$0x3]
        %vm413 = vcmask 539648
        %v415 = vsel %vm413, %v404, 0
        %v418 = vsel %vm413, %v405, 0
        %v421 = vsel %vm413, %v406, 0
        %v424 = vsel %vm413, %v407, 0
        %v427 = vsel %vm413, %v408, 0
        %v430 = vsel %vm413, %v409, 0
        %v433 = vsel %vm413, %v410, 0
        %v436 = vsel %vm413, %v411, 0
        %v439 = vsel %vm413, %v412, 0
        %v442 = vsel %vm298, %v403, 0
        %444 = vmatprep.subr.mxu0 0.0
        %445 = vmatpush1.msra.mxu0 0.0
        %446 = vmatprep.subr.mxu0 0.0
        %447 = vmatpush1.msra.mxu0 0.0
        %448 = vmatprep.subr.mxu0 0.0
        %449 = vmatpush1.msra.mxu0 0.0
        %450 = vmatprep.subr.mxu0 0.0
        %451 = vmatpush1.msra.mxu0 0.0
        %452 = vmatprep.subr.mxu0 0.0
        %453 = vmatpush1.msra.mxu0 0.0
        %454 = vmatprep.subr.mxu0 0.0
        %455 = vmatpush1.msra.mxu0 0.0
        %456 = vmatprep.subr.mxu0 0.0
        %457 = vmatpush1.msra.mxu0 0.0
        %458 = vmatprep.subr.mxu0 0.0
        %459 = vmatpush1.msra.mxu0 %v442
        %460 = vmatprep.subr.mxu0 0.0
        %461 = vmatpush1.msra.mxu0 %v402
        %462 = vmatprep.subr.mxu0 0.0
        %463 = vmatpush1.msra.mxu0 %v401
        %464 = vmatprep.subr.mxu0 0.0
        %465 = vmatpush1.msra.mxu0 %v400
        %466 = vmatprep.subr.mxu0 0.0
        %467 = vmatpush1.msra.mxu0 %v399
        %468 = vmatprep.subr.mxu0 0.0
        %469 = vmatpush1.msra.mxu0 %v398
        %470 = vmatprep.subr.mxu0 0.0
        %471 = vmatpush1.msra.mxu0 %v397
        %472 = vmatprep.subr.mxu0 0.0
        %473 = vmatpush1.msra.mxu0 %v396
        %474 = vmatprep.subr.mxu0 0.0
        %475 = vmatpush1.msra.mxu0 %v395
        %476 = vmatprep.subr.mxu0 0.0
        %477 = vmatpush2.msra.mxu0 0.0
        %478 = vmatprep.subr.mxu0 0.0
        %479 = vmatpush2.msra.mxu0 0.0
        %480 = vmatprep.subr.mxu0 0.0
        %481 = vmatpush2.msra.mxu0 0.0
        %482 = vmatprep.subr.mxu0 0.0
        %483 = vmatpush2.msra.mxu0 0.0
        %484 = vmatprep.subr.mxu0 0.0
        %485 = vmatpush2.msra.mxu0 0.0
        %486 = vmatprep.subr.mxu0 0.0
        %487 = vmatpush2.msra.mxu0 0.0
        %488 = vmatprep.subr.mxu0 0.0
        %489 = vmatpush2.msra.mxu0 0.0
        %490 = vmatprep.subr.mxu0 0.0
        %491 = vmatpush2.msra.mxu0 0.0
        %492 = vmatprep.subr.mxu0 0.0
        %493 = vmatpush2.msra.mxu0 0.0
        %494 = vmatprep.subr.mxu0 0.0
        %495 = vmatpush2.msra.mxu0 0.0
        %496 = vmatprep.subr.mxu0 0.0
        %497 = vmatpush2.msra.mxu0 0.0
        %498 = vmatprep.subr.mxu0 0.0
        %499 = vmatpush2.msra.mxu0 0.0
        %500 = vmatprep.subr.mxu0 0.0
        %501 = vmatpush2.msra.mxu0 0.0
        %502 = vmatprep.subr.mxu0 0.0
        %503 = vmatpush2.msra.mxu0 0.0
        %504 = vmatprep.subr.mxu0 0.0
        %505 = vmatpush2.msra.mxu0 0.0
        %506 = vmatprep.subr.mxu0 0.0
        %507 = vmatpush2.msra.mxu0 0.0
        %508 = vmatprep.mubr.f32.mxu0 0.0
        %509 = vmatmul.mubr.f32.gmra.mxu0 %v415
        %v510 = vpop.f32.mrf.mxu0
        %v511 = vadd.f32 0.0, %v510
        %v512 = vpop.f32.mrf.mxu0
        %513 = vmatprep.mubr.f32.mxu0 0.0
        %514 = vmatmul.mubr.f32.gmra.mxu0 %v418
        %v515 = vpop.f32.mrf.mxu0
        %v516 = vadd.f32 0.0, %v515
        %v517 = vpop.f32.mrf.mxu0
        %518 = vmatprep.mubr.f32.mxu0 0.0
        %519 = vmatmul.mubr.f32.gmra.mxu0 %v421
        %v520 = vpop.f32.mrf.mxu0
        %v521 = vadd.f32 0.0, %v520
        %v522 = vpop.f32.mrf.mxu0
        %523 = vmatprep.mubr.f32.mxu0 0.0
        %524 = vmatmul.mubr.f32.gmra.mxu0 %v424
        %v525 = vpop.f32.mrf.mxu0
        %v526 = vadd.f32 0.0, %v525
        %v527 = vpop.f32.mrf.mxu0
        %528 = vmatprep.mubr.f32.mxu0 0.0
        %529 = vmatmul.mubr.f32.gmra.mxu0 %v427
        %v530 = vpop.f32.mrf.mxu0
        %v531 = vadd.f32 0.0, %v530
        %v532 = vpop.f32.mrf.mxu0
        %533 = vmatprep.mubr.f32.mxu0 0.0
        %534 = vmatmul.mubr.f32.gmra.mxu0 %v430
        %v535 = vpop.f32.mrf.mxu0
        %v536 = vadd.f32 0.0, %v535
        %v537 = vpop.f32.mrf.mxu0
        %538 = vmatprep.mubr.f32.mxu0 0.0
        %539 = vmatmul.mubr.f32.gmra.mxu0 %v433
        %v540 = vpop.f32.mrf.mxu0
        %v541 = vadd.f32 0.0, %v540
        %v542 = vpop.f32.mrf.mxu0
        %543 = vmatprep.mubr.f32.mxu0 0.0
        %544 = vmatmul.mubr.f32.gmra.mxu0 %v436
        %v545 = vpop.f32.mrf.mxu0
        %v546 = vadd.f32 0.0, %v545
        %v547 = vpop.f32.mrf.mxu0
        %548 = vmatprep.mubr.f32.mxu0 0.0
        %549 = vmatmul.mubr.f32.gmra.mxu0 %v439
        %v550 = vpop.f32.mrf.mxu0
        %v551 = vadd.f32 0.0, %v550
        %v552 = vpop.f32.mrf.mxu0
        %553 = vdwg.mxu0
        %v554 = vmul.f32 %v511, %v354
        %v555 = vmul.f32 %v516, %v355
        %v556 = vmul.f32 %v521, %v356
        %v557 = vmul.f32 %v526, %v357
        %v558 = vmul.f32 %v531, %v358
        %v559 = vmul.f32 %v536, %v359
        %v560 = vmul.f32 %v541, %v360
        %v561 = vmul.f32 %v546, %v361
        %v562 = vmul.f32 %v551, %v362
        %s563 = smul.u32 %s19, 128
        %v564 = vlaneseq
        %v565 = vand.u32 %v564, 127
        %v566 = vstv %s563
        %v567 = vadd.s32 %v566, %v565
        %vm568 = vcmp.lt.s32.totalorder %v567, 200
        %v569 = vsel %vm568, 1, 0
        %vm570 = vcmp.eq.s32.totalorder %v569, 1
        %v571 = vsel %vm570, %v554, 0.0
        %v572 = vsel %vm570, %v555, 0.0
        %v573 = vsel %vm570, %v556, 0.0
        %v574 = vsel %vm570, %v557, 0.0
        %v575 = vsel %vm570, %v558, 0.0
        %v576 = vsel %vm570, %v559, 0.0
        %v577 = vsel %vm570, %v560, 0.0
        %v578 = vsel %vm570, %v561, 0.0
        %v579 = vsel %vm570, %v562, 0.0
        %v580 = vadd.f32 %v571, %v572
        %v581 = vadd.f32 %v580, %v573
        %v582 = vadd.f32 %v581, %v574
        %v583 = vadd.f32 %v582, %v575
        %v584 = vadd.f32 %v583, %v576
        %v585 = vadd.f32 %v584, %v577
        %v586 = vadd.f32 %v585, %v578
        %v587 = vsel %vm298, %v579, 0.0
        %v588 = vadd.f32 %v586, %v587
        %v589 = vrot.slane %v588, 4
        %v590 = vadd.f32 %v588, %v589
        %v591 = vrot.slane %v590, 2
        %v592 = vadd.f32 %v590, %v591
        %v593 = vrot.slane %v592, 1
        %v594 = vadd.f32 %v592, %v593
        %595 = vadd.xlane.f32.xlu0 %v594
        %v596 = vpop.xlane.xlu0 %595
        %v597 = vld [vmem:[#allocation2] sm:$0x1]
        %v598 = vadd.f32 %v597, %v596
        %vm599 = vcmask 0
        %600 = vst.msk [vmem:[#allocation2] sm:$0x1] %vm599, %v598
        %p601 = scmp.eq.s32.totalorder %s19, 1
        // Predicated region
        $region75: #{tpu_custom_call.1} parent=65 // pred_check
          %p602 = pneg %p601
        $region76: #{tpu_custom_call.1} parent=65 // pred_check_branch
          %604 = sbr.rel (%p602) target = $region78
        $region77: #{tpu_custom_call.1} parent=65 // pred_region
          %v605 = vld [vmem:[#allocation2] sm:$0x1]
          %v606 = vsub.f32 0.0, %v605
          %v607 = vmul.f32 %v606, 0.0025
          %608 = vst.msk [vmem:[%s277] sm:$0x1] %vm599, %v607
        $region78: #{tpu_custom_call.1} parent=65 // pred_fallthru
          _
        %p609 = scmp.lt.s32.totalorder %s18, 1
        %s610 = scalar_select %p609, %s18, 1
        %s611 = scalar_lea.vmem %s3, %s610
        // Predicated region
        $region79: #{tpu_custom_call.1} parent=65 // pred_check
          %p612 = pneg %p121
        $region80: #{tpu_custom_call.1} parent=65 // pred_check_branch
          %614 = sbr.rel (%p612) target = $region82
        $region81: #{tpu_custom_call.1} parent=65 // pred_region
          _
        $region82: #{tpu_custom_call.1} parent=65 // pred_fallthru
          _
      $region66: #{tpu_custom_call.1} parent=5 // pred_fallthru
        _
      %p615 = scmp.le.s32.totalorder 2, %s9
      // Predicated region
      $region83: #{tpu_custom_call.1} parent=5 // pred_check
        %p616 = pneg %p615
      $region84: #{tpu_custom_call.1} parent=5 // pred_check_branch
        %618 = sbr.rel (%p616) target = $region86
      $region85: #{tpu_custom_call.1} parent=5 // pred_region
        %s619 = ssub.s32 %s9, 2
        // Predicated region
        $region87: #{tpu_custom_call.1} parent=85 // pred_check
          %p620 = pneg %p127
        $region88: #{tpu_custom_call.1} parent=85 // pred_check_branch
          %622 = sbr.rel (%p620) target = $region90
        $region89: #{tpu_custom_call.1} parent=85 // pred_region
          %p623 = scmp.lt.s32.totalorder %s20, 1
          %s624 = scalar_select %p623, %s20, 1
          %s625 = scalar_lea.vmem %s3, %s624
        $region90: #{tpu_custom_call.1} parent=85 // pred_fallthru
          _
      $region86: #{tpu_custom_call.1} parent=5 // pred_fallthru
        _
    $region6: #{tpu_custom_call.1} parent=1 // loop_footer
      %s13 = sadd.s32 1, %s9
    $region7: #{tpu_custom_call.1} parent=1 // loop_footer_branch
      %8 = sbr.rel target = $region3
    $region8: #{tpu_custom_call.1} parent=1 // loop_exit
      _

</llo_original>
